<compile_context>
chip_gen: v7x
topology: tpu7x:2x2x1
jax: 0.10.0
libtpu: 0.0.40
codegen_flags: <defaults>
</compile_context>

<pallas_src>
import functools

import jax
import jax.numpy as jnp
import numpy as np
from jax.experimental import pallas as pl
from jax.experimental.pallas import tpu as pltpu


def _tversky_sums_kernel(x_ref, lbl_ref, out_ref,
                         inter_acc, sump_acc, cnt_acc,
                         *, hw, mask_tail):
    """Accumulates per-class sums for one batch image.

    x_ref:   (1, C, T)    logits tile (classes on sublanes, pixels on lanes)
    lbl_ref: (1, 1, T)    int32 labels tile
    out_ref: (1, 3, C, 1) per-image [inter; sum_p; count]
    *_acc:   (C, T) f32 lane-partial accumulators (VMEM scratch)
    """
    j = pl.program_id(1)

    @pl.when(j == 0)
    def _():
        inter_acc[...] = jnp.zeros_like(inter_acc)
        sump_acc[...] = jnp.zeros_like(sump_acc)
        cnt_acc[...] = jnp.zeros_like(cnt_acc)

    x = x_ref[0].astype(jnp.float32)              # (C, T)
    C, T = x.shape

    # softmax over the class (sublane) axis
    m = jnp.max(x, axis=0, keepdims=True)         # (1, T)
    e = jnp.exp(x - m)                            # (C, T)
    denom = jnp.sum(e, axis=0, keepdims=True)     # (1, T)
    p = e * pl.reciprocal(denom, approx=False)    # (C, T) probabilities

    lbl = lbl_ref[0]                              # (1, T) int32
    cls = jax.lax.broadcasted_iota(jnp.int32, (C, T), 0)
    t = (cls == lbl).astype(jnp.float32)          # (C, T) one-hot

    if mask_tail:
        # ragged tail: mask BOTH p and t so padded pixels contribute nothing
        pix = jax.lax.broadcasted_iota(jnp.int32, (1, T), 1) + j * T
        valid = (pix < hw).astype(jnp.float32)    # (1, T)
        p = p * valid
        t = t * valid

    # lane-partial accumulation; cross-pixel reduce deferred to the last step
    inter_acc[...] += p * t
    sump_acc[...] += p
    cnt_acc[...] += t

    @pl.when(j == pl.num_programs(1) - 1)
    def _():
        out_ref[0, 0] = jnp.sum(inter_acc[...], axis=-1, keepdims=True)  # (C,1)
        out_ref[0, 1] = jnp.sum(sump_acc[...], axis=-1, keepdims=True)   # (C,1)
        out_ref[0, 2] = jnp.sum(cnt_acc[...], axis=-1, keepdims=True)    # (C,1)


def _round_up(x, m):
    return ((x + m - 1) // m) * m


def _pick_tile_hw(hw, cap):
    """Largest lane-tile (multiple of 128) under `cap`, preferring exact divisors."""
    cap = min(cap, _round_up(hw, 128))
    cap = max(128, cap - cap % 128)
    if hw % 128 == 0:
        for t in range(cap, 0, -128):
            if hw % t == 0:
                if 4 * t >= cap:
                    return t          # divides exactly: no padding needed
                break
    return cap                        # ragged: pad lane axis + mask the tail


def tversky_loss(logits, true, alpha=0.3, beta=0.7, eps=1e-7,
                 vmem_budget_bytes=12 * 1024 * 1024):
    """Pallas implementation of TverskyLoss.forward for num_classes > 1.

    logits: [B, C, H, W] float (f32 or bf16 -- streamed in its native dtype)
    true:   [B, 1, H, W] or [B, H, W] int labels in [0, C)
    """
    B, C, H, W = logits.shape
    assert C > 1, "only the multi-class (softmax) branch is implemented"
    hw = H * W

    # Free, contiguous reshapes -- no host-side transpose / extra HBM pass.
    x = logits.reshape(B, C, hw)
    lbl = jnp.reshape(true, (B, 1, hw)).astype(jnp.int32)

    # Tile the pixel (lane) axis as large as the VMEM budget allows:
    # 2x double-buffered logits + 2x double-buffered labels + 3 f32 accumulators.
    per_pixel_bytes = 2 * C * logits.dtype.itemsize + 2 * 4 + 3 * C * 4
    cap = max(128, min(32768, int(vmem_budget_bytes // per_pixel_bytes)))
    tile_hw = _pick_tile_hw(hw, cap)

    hw_pad = _round_up(hw, tile_hw)
    mask_tail = hw_pad != hw
    if mask_tail:
        x = jnp.pad(x, ((0, 0), (0, 0), (0, hw_pad - hw)))
        lbl = jnp.pad(lbl, ((0, 0), (0, 0), (0, hw_pad - hw)))

    grid = (B, hw_pad // tile_hw)
    sums = pl.pallas_call(
        functools.partial(_tversky_sums_kernel, hw=hw, mask_tail=mask_tail),
        out_shape=jax.ShapeDtypeStruct((B, 3, C, 1), jnp.float32),
        grid_spec=pltpu.PrefetchScalarGridSpec(
            num_scalar_prefetch=0,
            grid=grid,
            in_specs=[
                pl.BlockSpec((1, C, tile_hw), lambda b, j: (b, 0, j)),
                pl.BlockSpec((1, 1, tile_hw), lambda b, j: (b, 0, j)),
            ],
            out_specs=pl.BlockSpec((1, 3, C, 1), lambda b, j: (b, 0, 0, 0)),
            scratch_shapes=[
                pltpu.VMEM((C, tile_hw), jnp.float32),
                pltpu.VMEM((C, tile_hw), jnp.float32),
                pltpu.VMEM((C, tile_hw), jnp.float32),
            ],
        ),
        compiler_params=pltpu.CompilerParams(
            # batch axis split across TensorCores on multi-core chips (v7x);
            # pixel-tile axis is the sequential accumulation axis.
            dimension_semantics=("parallel", "arbitrary")),
    )(x, lbl)

    # Tiny per-class finalize (3*C elements) in plain JAX.
    s = jnp.sum(sums[..., 0], axis=0)             # (3, C)
    inter, sum_p, count = s[0], s[1], s[2]
    fps = sum_p - inter                           # = sum p * (1 - t)
    fns = count - inter                           # = sum (1 - p) * t
    tversky = inter / (inter + alpha * fps + beta * fns + eps)
    return 1.0 - jnp.mean(tversky)


def _reference_tversky(logits, true, alpha=0.3, beta=0.7, eps=1e-7):
    """Pure-JAX reference mirroring the PyTorch module (true of shape [B,1,H,W])."""
    B, C, H, W = logits.shape
    t = jax.nn.one_hot(true.reshape(B, H, W), C, dtype=jnp.float32)   # [B,H,W,C]
    t = jnp.transpose(t, (0, 3, 1, 2))                                # [B,C,H,W]
    p = jax.nn.softmax(logits.astype(jnp.float32), axis=1)
    dims = (0, 2, 3)
    inter = jnp.sum(p * t, dims)
    fps = jnp.sum(p * (1.0 - t), dims)
    fns = jnp.sum((1.0 - p) * t, dims)
    tversky = inter / (inter + alpha * fps + beta * fns + eps)
    return 1.0 - jnp.mean(tversky)


if __name__ == "__main__":
    key = jax.random.PRNGKey(0)
    k1, k2 = jax.random.split(key)

    # main case: H*W is a multiple of 128 (no padding, no tail mask)
    B, C, H, W = 2, 4, 16, 16
    logits = jax.random.normal(k1, (B, C, H, W), dtype=jnp.float32)
    true = jax.random.randint(k2, (B, 1, H, W), 0, C, dtype=jnp.int32)

    loss = jax.block_until_ready(tversky_loss(logits, true))
    ref = jax.block_until_ready(_reference_tversky(logits, true))
    assert np.isfinite(float(loss))
    assert np.allclose(float(loss), float(ref), rtol=2e-5, atol=1e-5), (loss, ref)

    # ragged case: H*W not a multiple of 128 exercises the in-kernel tail mask
    H2, W2 = 10, 10
    logits2 = jax.random.normal(k1, (B, C, H2, W2), dtype=jnp.float32)
    true2 = jax.random.randint(k2, (B, 1, H2, W2), 0, C, dtype=jnp.int32)
    loss2 = jax.block_until_ready(tversky_loss(logits2, true2))
    ref2 = jax.block_until_ready(_reference_tversky(logits2, true2))
    assert np.allclose(float(loss2), float(ref2), rtol=2e-5, atol=1e-5), (loss2, ref2)

    print("KERNEL_OK")
</pallas_src>

<mosaic_0001>
module attributes {stable_mosaic.version = 11 : i64} {
  func.func @_tversky_sums_kernel(%arg0: i32, %arg1: i32, %arg2: memref<1x4x256xf32, #tpu.memory_space<vmem>>, %arg3: memref<1x1x256xi32, #tpu.memory_space<vmem>>, %arg4: memref<1x3x4x1xf32, #tpu.memory_space<vmem>>, %arg5: memref<4x256xf32, #tpu.memory_space<vmem>>, %arg6: memref<4x256xf32, #tpu.memory_space<vmem>>, %arg7: memref<4x256xf32, #tpu.memory_space<vmem>>) attributes {dimension_semantics = [#tpu.dimension_semantics<parallel>, #tpu.dimension_semantics<arbitrary>], iteration_bounds = array<i64: 2, 1>, scalar_prefetch = 0 : i64, scratch_operands = 3 : i64, tpu.core_type = #tpu.core_type<tc>, window_params = [{transform_indices = @transform_0, window_bounds = array<i64: 1, 4, 256>}, {transform_indices = @transform_1, window_bounds = array<i64: 1, 1, 256>}, {transform_indices = @transform_2, window_bounds = array<i64: 1, 3, 4, 1>}]} {
    %c0_i32 = arith.constant 0 : i32
    %0 = arith.cmpi eq, %arg1, %c0_i32 : i32
    %1 = arith.extui %0 : i1 to i32
    %c0_i32_0 = arith.constant 0 : i32
    %2 = arith.cmpi ne, %1, %c0_i32_0 : i32
    scf.if %2 {
      %cst_21 = arith.constant 0.000000e+00 : f32
      %35 = vector.broadcast %cst_21 : f32 to vector<4x256xf32>
      %c0_22 = arith.constant 0 : index
      %c0_23 = arith.constant 0 : index
      %36 = vector.load %arg5[%c0_22, %c0_23] : memref<4x256xf32, #tpu.memory_space<vmem>>, vector<4x256xf32>
      tpu.vector_store %arg5[%c0_22, %c0_23], %35 {strides = array<i32>} : memref<4x256xf32, #tpu.memory_space<vmem>>, vector<4x256xf32>,
      %cst_24 = arith.constant 0.000000e+00 : f32
      %37 = vector.broadcast %cst_24 : f32 to vector<4x256xf32>
      %c0_25 = arith.constant 0 : index
      %c0_26 = arith.constant 0 : index
      %38 = vector.load %arg6[%c0_25, %c0_26] : memref<4x256xf32, #tpu.memory_space<vmem>>, vector<4x256xf32>
      tpu.vector_store %arg6[%c0_25, %c0_26], %37 {strides = array<i32>} : memref<4x256xf32, #tpu.memory_space<vmem>>, vector<4x256xf32>,
      %cst_27 = arith.constant 0.000000e+00 : f32
      %39 = vector.broadcast %cst_27 : f32 to vector<4x256xf32>
      %c0_28 = arith.constant 0 : index
      %c0_29 = arith.constant 0 : index
      %40 = vector.load %arg7[%c0_28, %c0_29] : memref<4x256xf32, #tpu.memory_space<vmem>>, vector<4x256xf32>
      tpu.vector_store %arg7[%c0_28, %c0_29], %39 {strides = array<i32>} : memref<4x256xf32, #tpu.memory_space<vmem>>, vector<4x256xf32>,
    } else {
    }
    %c0 = arith.constant 0 : index
    %c0_1 = arith.constant 0 : index
    %c0_2 = arith.constant 0 : index
    %3 = vector.load %arg2[%c0, %c0_1, %c0_2] : memref<1x4x256xf32, #tpu.memory_space<vmem>>, vector<1x4x256xf32>
    %4 = vector.shape_cast %3 : vector<1x4x256xf32> to vector<4x256xf32>
    %cst = arith.constant dense<0xFF800000> : vector<256xf32>
    %5 = vector.multi_reduction <maximumf>, %4, %cst [0] : vector<4x256xf32> to vector<256xf32>
    %6 = vector.shape_cast %5 : vector<256xf32> to vector<1x256xf32>
    %7 = vector.broadcast %6 : vector<1x256xf32> to vector<4x256xf32>
    %8 = arith.subf %4, %7 : vector<4x256xf32>
    %9 = math.exp %8 : vector<4x256xf32>
    %cst_3 = arith.constant dense<0.000000e+00> : vector<256xf32>
    %10 = vector.multi_reduction <add>, %9, %cst_3 [0] : vector<4x256xf32> to vector<256xf32>
    %11 = vector.shape_cast %10 : vector<256xf32> to vector<1x256xf32>
    %12 = tpu.reciprocal %11 : vector<1x256xf32> -> vector<1x256xf32>
    %13 = vector.broadcast %12 : vector<1x256xf32> to vector<4x256xf32>
    %14 = arith.mulf %9, %13 : vector<4x256xf32>
    %c0_4 = arith.constant 0 : index
    %c0_5 = arith.constant 0 : index
    %c0_6 = arith.constant 0 : index
    %15 = vector.load %arg3[%c0_4, %c0_5, %c0_6] : memref<1x1x256xi32, #tpu.memory_space<vmem>>, vector<1x1x256xi32>
    %16 = vector.shape_cast %15 : vector<1x1x256xi32> to vector<1x256xi32>
    %17 = tpu.iota {dimensions = array<i32: 0>} : vector<4x256xi32>
    %18 = vector.broadcast %16 : vector<1x256xi32> to vector<4x256xi32>
    %19 = arith.cmpi eq, %17, %18 : vector<4x256xi32>
    %20 = arith.extui %19 : vector<4x256xi1> to vector<4x256xi32>
    %21 = arith.sitofp %20 : vector<4x256xi32> to vector<4x256xf32>
    %c0_7 = arith.constant 0 : index
    %c0_8 = arith.constant 0 : index
    %22 = vector.load %arg5[%c0_7, %c0_8] : memref<4x256xf32, #tpu.memory_space<vmem>>, vector<4x256xf32>
    %23 = arith.mulf %14, %21 : vector<4x256xf32>
    %24 = arith.addf %22, %23 : vector<4x256xf32>
    %c0_9 = arith.constant 0 : index
    %c0_10 = arith.constant 0 : index
    %25 = vector.load %arg5[%c0_9, %c0_10] : memref<4x256xf32, #tpu.memory_space<vmem>>, vector<4x256xf32>
    tpu.vector_store %arg5[%c0_9, %c0_10], %24 {strides = array<i32>} : memref<4x256xf32, #tpu.memory_space<vmem>>, vector<4x256xf32>,
    %c0_11 = arith.constant 0 : index
    %c0_12 = arith.constant 0 : index
    %26 = vector.load %arg6[%c0_11, %c0_12] : memref<4x256xf32, #tpu.memory_space<vmem>>, vector<4x256xf32>
    %27 = arith.addf %26, %14 : vector<4x256xf32>
    %c0_13 = arith.constant 0 : index
    %c0_14 = arith.constant 0 : index
    %28 = vector.load %arg6[%c0_13, %c0_14] : memref<4x256xf32, #tpu.memory_space<vmem>>, vector<4x256xf32>
    tpu.vector_store %arg6[%c0_13, %c0_14], %27 {strides = array<i32>} : memref<4x256xf32, #tpu.memory_space<vmem>>, vector<4x256xf32>,
    %c0_15 = arith.constant 0 : index
    %c0_16 = arith.constant 0 : index
    %29 = vector.load %arg7[%c0_15, %c0_16] : memref<4x256xf32, #tpu.memory_space<vmem>>, vector<4x256xf32>
    %30 = arith.addf %29, %21 : vector<4x256xf32>
    %c0_17 = arith.constant 0 : index
    %c0_18 = arith.constant 0 : index
    %31 = vector.load %arg7[%c0_17, %c0_18] : memref<4x256xf32, #tpu.memory_space<vmem>>, vector<4x256xf32>
    tpu.vector_store %arg7[%c0_17, %c0_18], %30 {strides = array<i32>} : memref<4x256xf32, #tpu.memory_space<vmem>>, vector<4x256xf32>,
    %c0_i32_19 = arith.constant 0 : i32
    %32 = arith.cmpi eq, %arg1, %c0_i32_19 : i32
    %33 = arith.extui %32 : i1 to i32
    %c0_i32_20 = arith.constant 0 : i32
    %34 = arith.cmpi ne, %33, %c0_i32_20 : i32
    scf.if %34 {
      %c0_21 = arith.constant 0 : index
      %c0_22 = arith.constant 0 : index
      %35 = vector.load %arg5[%c0_21, %c0_22] : memref<4x256xf32, #tpu.memory_space<vmem>>, vector<4x256xf32>
      %cst_23 = arith.constant dense<0.000000e+00> : vector<4xf32>
      %36 = vector.multi_reduction <add>, %35, %cst_23 [1] : vector<4x256xf32> to vector<4xf32>
      %37 = vector.shape_cast %36 : vector<4xf32> to vector<4x1xf32>
      %c0_24 = arith.constant 0 : index
      %c0_25 = arith.constant 0 : index
      %c0_26 = arith.constant 0 : index
      %c0_27 = arith.constant 0 : index
      %38 = vector.load %arg4[%c0_24, %c0_25, %c0_26, %c0_27] : memref<1x3x4x1xf32, #tpu.memory_space<vmem>>, vector<1x1x4x1xf32>
      %39 = vector.shape_cast %38 : vector<1x1x4x1xf32> to vector<4x1xf32>
      %40 = vector.shape_cast %37 : vector<4x1xf32> to vector<1x1x4x1xf32>
      tpu.vector_store %arg4[%c0_24, %c0_25, %c0_26, %c0_27], %40 {strides = array<i32>} : memref<1x3x4x1xf32, #tpu.memory_space<vmem>>, vector<1x1x4x1xf32>,
      %c0_28 = arith.constant 0 : index
      %c0_29 = arith.constant 0 : index
      %41 = vector.load %arg6[%c0_28, %c0_29] : memref<4x256xf32, #tpu.memory_space<vmem>>, vector<4x256xf32>
      %cst_30 = arith.constant dense<0.000000e+00> : vector<4xf32>
      %42 = vector.multi_reduction <add>, %41, %cst_30 [1] : vector<4x256xf32> to vector<4xf32>
      %43 = vector.shape_cast %42 : vector<4xf32> to vector<4x1xf32>
      %c0_31 = arith.constant 0 : index
      %c1 = arith.constant 1 : index
      %c0_32 = arith.constant 0 : index
      %c0_33 = arith.constant 0 : index
      %44 = vector.load %arg4[%c0_31, %c1, %c0_32, %c0_33] : memref<1x3x4x1xf32, #tpu.memory_space<vmem>>, vector<1x1x4x1xf32>
      %45 = vector.shape_cast %44 : vector<1x1x4x1xf32> to vector<4x1xf32>
      %46 = vector.shape_cast %43 : vector<4x1xf32> to vector<1x1x4x1xf32>
      tpu.vector_store %arg4[%c0_31, %c1, %c0_32, %c0_33], %46 {strides = array<i32>} : memref<1x3x4x1xf32, #tpu.memory_space<vmem>>, vector<1x1x4x1xf32>,
      %c0_34 = arith.constant 0 : index
      %c0_35 = arith.constant 0 : index
      %47 = vector.load %arg7[%c0_34, %c0_35] : memref<4x256xf32, #tpu.memory_space<vmem>>, vector<4x256xf32>
      %cst_36 = arith.constant dense<0.000000e+00> : vector<4xf32>
      %48 = vector.multi_reduction <add>, %47, %cst_36 [1] : vector<4x256xf32> to vector<4xf32>
      %49 = vector.shape_cast %48 : vector<4xf32> to vector<4x1xf32>
      %c0_37 = arith.constant 0 : index
      %c2 = arith.constant 2 : index
      %c0_38 = arith.constant 0 : index
      %c0_39 = arith.constant 0 : index
      %50 = vector.load %arg4[%c0_37, %c2, %c0_38, %c0_39] : memref<1x3x4x1xf32, #tpu.memory_space<vmem>>, vector<1x1x4x1xf32>
      %51 = vector.shape_cast %50 : vector<1x1x4x1xf32> to vector<4x1xf32>
      %52 = vector.shape_cast %49 : vector<4x1xf32> to vector<1x1x4x1xf32>
      tpu.vector_store %arg4[%c0_37, %c2, %c0_38, %c0_39], %52 {strides = array<i32>} : memref<1x3x4x1xf32, #tpu.memory_space<vmem>>, vector<1x1x4x1xf32>,
    } else {
    }
    return
  }
  func.func @transform_0(%arg0: i32, %arg1: i32) -> (i32, i32, i32) {
    %c0_i32 = arith.constant 0 : i32
    %c0_i32_0 = arith.constant 0 : i32
    return %arg0, %c0_i32, %arg1 : i32, i32, i32
  }
  func.func @transform_1(%arg0: i32, %arg1: i32) -> (i32, i32, i32) {
    %c0_i32 = arith.constant 0 : i32
    %c0_i32_0 = arith.constant 0 : i32
    return %arg0, %c0_i32, %arg1 : i32, i32, i32
  }
  func.func @transform_2(%arg0: i32, %arg1: i32) -> (i32, i32, i32, i32) {
    %c0_i32 = arith.constant 0 : i32
    %c0_i32_0 = arith.constant 0 : i32
    %c0_i32_1 = arith.constant 0 : i32
    %c0_i32_2 = arith.constant 0 : i32
    return %arg0, %c0_i32, %c0_i32_0, %c0_i32_1 : i32, i32, i32, i32
  }
}

</mosaic_0001>

<llo_original>
// kernel: tpu_custom_call.1
$region0: #{tpu_custom_call.1}
  #allocation0 [shape = 'u32[]', space=smem, size = 0x4, offset = 0x4, fixed_abs, tag = 'smem constant byte address 0x4 - core index']
  #allocation1 [shape = 'u32[144,128]{1,0:T(1,128)}', space=vmem, size = 0x12000, scoped, tag = 'internal scratch']
  #allocation2 [shape = 'f32[4,256]{1,0:T(4,128)}', space=vmem, size = 0x1000, scoped, tag = 'scratch operand']
  #allocation3 [shape = 'f32[4,256]{1,0:T(4,128)}', space=vmem, size = 0x1000, scoped, tag = 'scratch operand']
  #allocation4 [shape = 'f32[4,256]{1,0:T(4,128)}', space=vmem, size = 0x1000, scoped, tag = 'scratch operand']
  %s0 = inlined_call_operand.hbm [shape: f32[2,4,256], index: 0, kind: input, shape index: {}]
  %s1 = inlined_call_operand.hbm [shape: s32[2,1,256], index: 1, kind: input, shape index: {}]
  %s2 = inlined_call_operand.vmem [shape: f32[2,3,4,1], index: 2, kind: output, shape index: {}]
  %s3 = sld [smem:[#allocation0]]
  $region57: #{tpu_custom_call.1} parent=0
    _
  %s5 = ssub.s32 1, %s3
  %s6 = scalar_select 0, %s5, %s3
  $region1: #{tpu_custom_call.1} parent=0
    #allocation5 [shape = 'u8[8192]{0}', space=vmem, size = 0x2000, scoped, tag = 'input window, operand 0']
    #allocation6 [shape = 's32[2]{0}', space=sflag, size = 0x8, scoped, tag = 'scoped memory for tpu_custom_call.1']
    #allocation7 [shape = 'u8[2048]{0}', space=vmem, size = 0x800, scoped, tag = 'input window, operand 1']
    #allocation8 [shape = 's32[2]{0}', space=sflag, size = 0x8, scoped, tag = 'scoped memory for tpu_custom_call.1']
    %7 = vsyncpa [#allocation6], 0
    %s8 = scalar_lea.sflag [#allocation6], 1
    %9 = vsyncpa %s8, 0
    %10 = vsyncpa [#allocation8], 0
    %s11 = scalar_lea.sflag [#allocation8], 1
    %12 = vsyncpa %s11, 0
    loop: start=0, step=1, limit=4
    $region2: #{tpu_custom_call.1} parent=1 // loop_pre_header
      _
    $region3: #{tpu_custom_call.1} parent=1 // loop_header
      %s14 = sphi 0, %s18
      %p15 = scmp.ge.s32.totalorder %s14, 4
      %s21 = sphi 0, %s33
      %s22 = sphi 0, %s29
      %s23 = sphi 0, %s21
      %s24 = sphi 0, %s22
      %s25 = sphi 0, %s23
      %s26 = sphi 0, %s24
      %s38 = sphi 0, %s40
      %s41 = sphi 0, %s38
      %s42 = sphi 0, %s41
      %s58 = sphi 0, %s42
      %s66 = sphi 0, %s68
      %s69 = sphi 0, %s66
      %s70 = sphi 0, %s69
      %s86 = sphi 0, %s70
      %s92 = sphi 0, %s94
      %s95 = sphi 0, %s92
      %s96 = sphi 0, %s95
      %s112 = sphi 0, %s96
    $region4: #{tpu_custom_call.1} parent=1 // loop_header_branch
      %17 = sbr.rel (%p15) target = $region8
    $region5: #{tpu_custom_call.1} parent=1 // loop_body
      %s19 = ssub.s32 %s14, 1
      %s20 = ssub.s32 %s14, 2
      %s27 = sadd.s32 1, %s22
      %p28 = scmp.ge.s32.totalorder %s27, 1
      %s29 = scalar_select %p28, 0, %s27
      %s30 = sadd.s32 1, %s21
      %s31 = scalar_select %p28, %s30, %s21
      %p32 = scmp.ge.s32.totalorder %s31, 2
      %s33 = scalar_select %p32, 0, %s31
      %s34 = ssub.s32 %s21, %s33
      %s35 = ssub.s32 %s22, %s29
      %s36 = sor.u32 %s34, %s35
      %p37 = scmp.eq.s32.totalorder %s36, 0
      %s39 = sadd.s32 %s38, 1
      %s40 = scalar_select %p37, %s38, %s39
      %p43 = pneg %p37
      %p44 = scmp.eq.s32.totalorder %s14, 1
      %p45 = por %p43, %p44
      %p46 = scmp.ne.s32.totalorder %s38, %s41
      %p47 = scmp.eq.s32.totalorder %s14, 0
      %p48 = por %p46, %p47
      %p49 = scmp.ne.s32.totalorder %s38, %s41
      %p50 = scmp.eq.s32.totalorder %s19, 1
      %p51 = por %p49, %p50
      %p52 = scmp.ne.s32.totalorder %s41, %s42
      %p53 = scmp.eq.s32.totalorder %s19, 0
      %p54 = por %p52, %p53
      %p55 = scmp.ne.s32.totalorder %s41, %s42
      %p56 = scmp.eq.s32.totalorder %s20, 1
      %p57 = por %p55, %p56
      %p59 = scmp.ne.s32.totalorder %s42, %s58
      %p60 = scmp.eq.s32.totalorder %s20, 0
      %p61 = por %p59, %p60
      %s62 = ssub.s32 %s21, %s33
      %s63 = ssub.s32 %s22, %s29
      %s64 = sor.u32 %s62, %s63
      %p65 = scmp.eq.s32.totalorder %s64, 0
      %s67 = sadd.s32 %s66, 1
      %s68 = scalar_select %p65, %s66, %s67
      %p71 = pneg %p65
      %p72 = scmp.eq.s32.totalorder %s14, 1
      %p73 = por %p71, %p72
      %p74 = scmp.ne.s32.totalorder %s66, %s69
      %p75 = scmp.eq.s32.totalorder %s14, 0
      %p76 = por %p74, %p75
      %p77 = scmp.ne.s32.totalorder %s66, %s69
      %p78 = scmp.eq.s32.totalorder %s19, 1
      %p79 = por %p77, %p78
      %p80 = scmp.ne.s32.totalorder %s69, %s70
      %p81 = scmp.eq.s32.totalorder %s19, 0
      %p82 = por %p80, %p81
      %p83 = scmp.ne.s32.totalorder %s69, %s70
      %p84 = scmp.eq.s32.totalorder %s20, 1
      %p85 = por %p83, %p84
      %p87 = scmp.ne.s32.totalorder %s70, %s86
      %p88 = scmp.eq.s32.totalorder %s20, 0
      %p89 = por %p87, %p88
      %s90 = ssub.s32 %s21, %s33
      %p91 = scmp.eq.s32.totalorder %s90, 0
      %s93 = sadd.s32 %s92, 1
      %s94 = scalar_select %p91, %s92, %s93
      %p97 = pneg %p91
      %p98 = scmp.eq.s32.totalorder %s14, 1
      %p99 = por %p97, %p98
      %p100 = scmp.ne.s32.totalorder %s92, %s95
      %p101 = scmp.eq.s32.totalorder %s14, 0
      %p102 = por %p100, %p101
      %p103 = scmp.ne.s32.totalorder %s92, %s95
      %p104 = scmp.eq.s32.totalorder %s19, 1
      %p105 = por %p103, %p104
      %p106 = scmp.ne.s32.totalorder %s95, %s96
      %p107 = scmp.eq.s32.totalorder %s19, 0
      %p108 = por %p106, %p107
      %p109 = scmp.ne.s32.totalorder %s95, %s96
      %p110 = scmp.eq.s32.totalorder %s20, 1
      %p111 = por %p109, %p110
      %p113 = scmp.ne.s32.totalorder %s96, %s112
      %p114 = scmp.eq.s32.totalorder %s20, 0
      %p115 = por %p113, %p114
      %p116 = scmp.le.s32.totalorder 1, %s14
      %p117 = scmp.lt.s32.totalorder %s14, 3
      %p118 = pnand %p116, %p117
      %p119 = pneg %p118
      // Predicated region
      $region9: #{tpu_custom_call.1} parent=5 // pred_check
        _
      $region10: #{tpu_custom_call.1} parent=5 // pred_check_branch
        %121 = sbr.rel (%p118) target = $region12
      $region11: #{tpu_custom_call.1} parent=5 // pred_region
        %s122 = ssub.s32 %s14, 1
      $region12: #{tpu_custom_call.1} parent=5 // pred_fallthru
        _
      %p123 = scmp.lt.s32.totalorder %s14, 2
      // Predicated region
      $region13: #{tpu_custom_call.1} parent=5 // pred_check
        %p124 = pneg %p123
      $region14: #{tpu_custom_call.1} parent=5 // pred_check_branch
        %126 = sbr.rel (%p124) target = $region16
      $region15: #{tpu_custom_call.1} parent=5 // pred_region
        // Predicated region
        $region17: #{tpu_custom_call.1} parent=15 // pred_check
          %p127 = pneg %p48
        $region18: #{tpu_custom_call.1} parent=15 // pred_check_branch
          %129 = sbr.rel (%p127) target = $region20
        $region19: #{tpu_custom_call.1} parent=15 // pred_region
          %s130 = sand.u32 %s38, 1
          %s131 = scalar_lea.sflag [#allocation6], %s130
          %s132 = sand.u32 %s38, 1
          %s133 = smul.addr %s132, 8
          %s134 = scalar_lea.vmem [#allocation5], %s133
          %s135 = smul.u32 2, %s22
          %s137 = ssub.s32 128, 128
          %138 = vsyncadd %s131, %s137
          %s139 = smul.addr %s21, 2
          %s140 = sadd.s32 %s135, %s139
          %s141 = smul.addr %s140, 64
          %s142 = scalar_lea.hbm %s0, %s141
          %s144 = sshll.u32 %s134, 4
          %s145 = int_to_ptr.vmem [resolvable:$true] %s144
          %147 = dma.hbm_to_vmem [thread:$0]  %s142, 128, %s145, %s131
        $region20: #{tpu_custom_call.1} parent=15 // pred_fallthru
          _
        // Predicated region
        $region21: #{tpu_custom_call.1} parent=15 // pred_check
          %p148 = pneg %p76
        $region22: #{tpu_custom_call.1} parent=15 // pred_check_branch
          %150 = sbr.rel (%p148) target = $region24
        $region23: #{tpu_custom_call.1} parent=15 // pred_region
          %s151 = sand.u32 %s66, 1
          %s152 = scalar_lea.sflag [#allocation8], %s151
          %s153 = sand.u32 %s66, 1
          %s154 = smul.addr %s153, 2
          %s155 = scalar_lea.vmem [#allocation7], %s154
          %s156 = smul.u32 2, %s22
          %s158 = ssub.s32 32, 32
          %159 = vsyncadd %s152, %s158
          %s160 = smul.addr %s21, 2
          %s161 = sadd.s32 %s156, %s160
          %s162 = smul.addr %s161, 16
          %s163 = scalar_lea.hbm %s1, %s162
          %s165 = sshll.u32 %s155, 4
          %s166 = int_to_ptr.vmem [resolvable:$true] %s165
          %168 = dma.hbm_to_vmem [thread:$0]  %s163, 32, %s166, %s152
        $region24: #{tpu_custom_call.1} parent=15 // pred_fallthru
          _
      $region16: #{tpu_custom_call.1} parent=5 // pred_fallthru
        _
      %p169 = scmp.le.s32.totalorder 1, %s14
      %p170 = scmp.lt.s32.totalorder %s14, 3
      %p171 = pnand %p169, %p170
      %p172 = pneg %p171
      // Predicated region
      $region25: #{tpu_custom_call.1} parent=5 // pred_check
        _
      $region26: #{tpu_custom_call.1} parent=5 // pred_check_branch
        %174 = sbr.rel (%p171) target = $region28
      $region27: #{tpu_custom_call.1} parent=5 // pred_region
        %s175 = ssub.s32 %s14, 1
        %s176 = sand.u32 %s41, 1
        %s177 = scalar_lea.sflag [#allocation6], %s176
        %s178 = sand.u32 %s41, 1
        %s179 = smul.addr %s178, 8
        %s180 = scalar_lea.vmem [#allocation5], %s179
        // Predicated region
        $region29: #{tpu_custom_call.1} parent=27 // pred_check
          %p181 = pneg %p54
        $region30: #{tpu_custom_call.1} parent=27 // pred_check_branch
          %183 = sbr.rel (%p181) target = $region32
        $region31: #{tpu_custom_call.1} parent=27 // pred_region
          %184 = dma.done %s177, 128
        $region32: #{tpu_custom_call.1} parent=27 // pred_fallthru
          _
        %s185 = sand.u32 %s69, 1
        %s186 = scalar_lea.sflag [#allocation8], %s185
        %s187 = sand.u32 %s69, 1
        %s188 = smul.addr %s187, 2
        %s189 = scalar_lea.vmem [#allocation7], %s188
        // Predicated region
        $region33: #{tpu_custom_call.1} parent=27 // pred_check
          %p190 = pneg %p82
        $region34: #{tpu_custom_call.1} parent=27 // pred_check_branch
          %192 = sbr.rel (%p190) target = $region36
        $region35: #{tpu_custom_call.1} parent=27 // pred_region
          %193 = dma.done %s186, 32
        $region36: #{tpu_custom_call.1} parent=27 // pred_fallthru
          _
        %s194 = sand.u32 %s41, 1
        %s195 = scalar_lea.sflag [#allocation6], %s194
        %s196 = sand.u32 %s41, 1
        %s197 = smul.addr %s196, 8
        %s198 = scalar_lea.vmem [#allocation5], %s197
        %p199 = pneg %p54
        %p200 = pneg %p51
        %s201 = sand.u32 %s69, 1
        %s202 = scalar_lea.sflag [#allocation8], %s201
        %s203 = sand.u32 %s69, 1
        %s204 = smul.addr %s203, 2
        %s205 = scalar_lea.vmem [#allocation7], %s204
        %p206 = pneg %p82
        %p207 = pneg %p79
        %p208 = pneg %p108
        %p209 = pneg %p105
        %p210 = scmp.lt.s32.totalorder %s23, 1
        %s211 = scalar_select %p210, %s23, 1
        %s212 = smul.addr %s211, 3
        %s213 = smul.addr %s212, 4
        %s214 = scalar_lea.vmem %s2, %s213
        %s215 = smul.u32 2, %s24
        %s216 = smul.u32 2, %s24
        %p217 = scmp.lt.s32.totalorder %s23, 1
        %s218 = scalar_select %p217, %s23, 1
        %s219 = smul.addr %s218, 3
        %s220 = smul.addr %s219, 4
        %s221 = scalar_lea.vmem %s2, %s220
        %p222 = scmp.eq.s32.totalorder %s24, 0
        // Predicated region
        $region37: #{tpu_custom_call.1} parent=27 // pred_check
          %p223 = pneg %p222
        $region38: #{tpu_custom_call.1} parent=27 // pred_check_branch
          %225 = sbr.rel (%p223) target = $region40
        $region39: #{tpu_custom_call.1} parent=27 // pred_region
          %226 = vst [vmem:[#allocation2] sm:$0xff] 0.0
          %227 = vst [vmem:[#allocation3] sm:$0xff] 0.0
          %228 = vst [vmem:[#allocation4] sm:$0xff] 0.0
        $region40: #{tpu_custom_call.1} parent=27 // pred_fallthru
          _
        %v229 = vld [vmem:[%s180] sm:$0xff]
        %v231 = vcombine.high %v229, %v229
        %vm233 = vcmask 1043456
        %v234 = vsel %vm233, %v229, -inf
        %v235 = vrot.slane %v234, 4
        %v236 = vmax.f32 %v234, %v235
        %v237 = vrot.slane %v236, 2
        %v238 = vmax.f32 %v236, %v237
        %v239 = vrot.slane %v238, 1
        %v240 = vmax.f32 %v238, %v239
        %v241 = vsel %vm233, %v231, -inf
        %v242 = vrot.slane %v241, 4
        %v243 = vmax.f32 %v241, %v242
        %v244 = vrot.slane %v243, 2
        %v245 = vmax.f32 %v243, %v244
        %v246 = vrot.slane %v245, 1
        %v247 = vmax.f32 %v245, %v246
        %v250 = vcombine.low %v240, %v247
        %v252 = vsub.f32 %v229, %v250
        %v253 = vmul.f32 %v252, 1.442695
        %v254 = vpow.pop %v253
        %v256 = vcombine.high %v254, %v254
        %v258 = vsel %vm233, %v254, 0.0
        %v259 = vrot.slane %v258, 4
        %v260 = vadd.f32 %v258, %v259
        %v261 = vrot.slane %v260, 2
        %v262 = vadd.f32 %v260, %v261
        %v263 = vrot.slane %v262, 1
        %v264 = vadd.f32 %v262, %v263
        %v265 = vsel %vm233, %v256, 0.0
        %v266 = vrot.slane %v265, 4
        %v267 = vadd.f32 %v265, %v266
        %v268 = vrot.slane %v267, 2
        %v269 = vadd.f32 %v267, %v268
        %v270 = vrot.slane %v269, 1
        %v271 = vadd.f32 %v269, %v270
        %v272 = vrcp.pop %v264
        %v273 = vrcp.pop %v271
        %v276 = vcombine.low %v272, %v273
        %v278 = vmul.f32 %v254, %v276
        %v279 = vld [vmem:[%s189] sm:$0x3]
        %v280 = vlaneseq
        %v281 = vshrl.u32 %v280, 7
        %v282 = vlaneseq
        %v283 = vshrl.u32 %v282, 7
        %v284 = vsub.s32 0, %v283
        %v285 = vrot.slane %v279, %v284
        %v286 = vlaneseq
        %v287 = vshrl.u32 %v286, 7
        %v288 = vsub.s32 1, %v287
        %v289 = vrot.slane %v279, %v288
        %vm290 = vcmp.eq.s32.totalorder %v281, %v285
        %vm291 = vcmp.eq.s32.totalorder %v281, %v289
        %v292 = vsel %vm290, 1, 0
        %v293 = vsel %vm291, 1, 0
        %v294 = vcvt.s32.f32 %v292
        %v295 = vcvt.s32.f32 %v293
        %v296 = vld [vmem:[#allocation2] sm:$0xff]
        %v299 = vcombine.low %v294, %v295
        %v301 = vmul.f32 %v278, %v299
        %v302 = vadd.f32 %v296, %v301
        %303 = vst [vmem:[#allocation2] sm:$0xff] %v302
        %v304 = vld [vmem:[#allocation3] sm:$0xff]
        %v305 = vadd.f32 %v304, %v278
        %306 = vst [vmem:[#allocation3] sm:$0xff] %v305
        %v307 = vld [vmem:[#allocation4] sm:$0xff]
        %v308 = vadd.f32 %v307, %v299
        %309 = vst [vmem:[#allocation4] sm:$0xff] %v308
        // Predicated region
        $region41: #{tpu_custom_call.1} parent=27 // pred_check
          %p310 = pneg %p222
        $region42: #{tpu_custom_call.1} parent=27 // pred_check_branch
          %312 = sbr.rel (%p310) target = $region44
        $region43: #{tpu_custom_call.1} parent=27 // pred_region
          %v313 = vld [vmem:[#allocation2] sm:$0xff]
          %v315 = vcombine.high %v313, %v313
          %v317 = vsel %vm233, %v313, 0.0
          %v318 = vsel %vm233, %v315, 0.0
          %v319 = vadd.f32 %v317, %v318
          %320 = vadd.xlane.f32.xlu0 %v319
          %v321 = vpop.xlane.xlu0 %320
          %vm322 = vcmask 3072
          %323 = vst.msk [vmem:[%s221] sm:$0xf] %vm322, %v321
          %v324 = vld [vmem:[#allocation3] sm:$0xff]
          %v326 = vcombine.high %v324, %v324
          %v328 = vsel %vm233, %v324, 0.0
          %v329 = vsel %vm233, %v326, 0.0
          %v330 = vadd.f32 %v328, %v329
          %331 = vadd.xlane.f32.xlu0 %v330
          %v332 = vpop.xlane.xlu0 %331
          %s333 = scalar_lea.vmem %s221, 4
          %334 = vst.msk [vmem:[%s333] sm:$0xf] %vm322, %v332
          %v335 = vld [vmem:[#allocation4] sm:$0xff]
          %v337 = vcombine.high %v335, %v335
          %v339 = vsel %vm233, %v335, 0.0
          %v340 = vsel %vm233, %v337, 0.0
          %v341 = vadd.f32 %v339, %v340
          %342 = vadd.xlane.f32.xlu0 %v341
          %v343 = vpop.xlane.xlu0 %342
          %s344 = scalar_lea.vmem %s221, 8
          %345 = vst.msk [vmem:[%s344] sm:$0xf] %vm322, %v343
        $region44: #{tpu_custom_call.1} parent=27 // pred_fallthru
          _
        %p346 = scmp.lt.s32.totalorder %s23, 1
        %s347 = scalar_select %p346, %s23, 1
        %s348 = smul.addr %s347, 3
        %s349 = smul.addr %s348, 4
        %s350 = scalar_lea.vmem %s2, %s349
        // Predicated region
        $region45: #{tpu_custom_call.1} parent=27 // pred_check
          %p351 = pneg %p105
        $region46: #{tpu_custom_call.1} parent=27 // pred_check_branch
          %353 = sbr.rel (%p351) target = $region48
        $region47: #{tpu_custom_call.1} parent=27 // pred_region
          _
        $region48: #{tpu_custom_call.1} parent=27 // pred_fallthru
          _
      $region28: #{tpu_custom_call.1} parent=5 // pred_fallthru
        _
      %p354 = scmp.le.s32.totalorder 2, %s14
      // Predicated region
      $region49: #{tpu_custom_call.1} parent=5 // pred_check
        %p355 = pneg %p354
      $region50: #{tpu_custom_call.1} parent=5 // pred_check_branch
        %357 = sbr.rel (%p355) target = $region52
      $region51: #{tpu_custom_call.1} parent=5 // pred_region
        %s358 = ssub.s32 %s14, 2
        // Predicated region
        $region53: #{tpu_custom_call.1} parent=51 // pred_check
          %p359 = pneg %p111
        $region54: #{tpu_custom_call.1} parent=51 // pred_check_branch
          %361 = sbr.rel (%p359) target = $region56
        $region55: #{tpu_custom_call.1} parent=51 // pred_region
          %p362 = scmp.lt.s32.totalorder %s25, 1
          %s363 = scalar_select %p362, %s25, 1
          %s364 = smul.addr %s363, 3
          %s365 = smul.addr %s364, 4
          %s366 = scalar_lea.vmem %s2, %s365
        $region56: #{tpu_custom_call.1} parent=51 // pred_fallthru
          _
      $region52: #{tpu_custom_call.1} parent=5 // pred_fallthru
        _
    $region6: #{tpu_custom_call.1} parent=1 // loop_footer
      %s18 = sadd.s32 1, %s14
    $region7: #{tpu_custom_call.1} parent=1 // loop_footer_branch
      %13 = sbr.rel target = $region3
    $region8: #{tpu_custom_call.1} parent=1 // loop_exit
      _
    %367 = vsyncpa [#allocation6], 1
    %s368 = scalar_lea.sflag [#allocation6], 1
    %369 = vsyncpa %s368, 1
    %370 = vsyncpa [#allocation8], 1
    %s371 = scalar_lea.sflag [#allocation8], 1
    %372 = vsyncpa %s371, 1

</llo_original>
